<compile_context>
chip_gen: v6e
topology: v6e:2x2x1
jax: 0.10.0
libtpu: 0.0.40
codegen_flags: <defaults>
</compile_context>

<pallas_src>
import jax
import jax.numpy as jnp
from jax.experimental import pallas as pl
from jax.experimental.pallas import tpu as pltpu

MAX_TILE_B = 512  # lane-dense batch tile for large batches


def _mlp_kernel(xT_ref, w1_ref, b1_ref, w2_ref, b2_ref, w3_ref, b3_ref, o_ref):
    xT = xT_ref[...]          # (5, TB)   batch on lanes
    w1 = w1_ref[...]          # (32, 5)   PyTorch [out, in] layout
    b1 = b1_ref[...]          # (32, 1)

    # ---- Layer 1: K=5 contraction as unrolled VPU broadcast-FMAs (outer products)
    h1 = w1[:, 0:1] * xT[0:1, :]
    for k in range(1, 5):
        h1 = h1 + w1[:, k:k + 1] * xT[k:k + 1, :]
    h1 = jnp.maximum(h1 + b1, 0.0)                       # (32, TB)

    # ---- Layer 2: (64, 32) @ (32, TB) on the MXU, f32 accumulation
    h2 = jnp.dot(w2_ref[...], h1, preferred_element_type=jnp.float32) + b2_ref[...]
    h2 = jnp.maximum(h2, 0.0)                            # (64, TB)

    # ---- Layer 3: (2, 64) @ (64, TB) on the MXU
    out = jnp.dot(w3_ref[...], h2, preferred_element_type=jnp.float32) + b3_ref[...]
    o_ref[...] = out.astype(o_ref.dtype)                 # (2, TB) lane-dense store


def _round_up(n, m):
    return ((n + m - 1) // m) * m


def generator_ring_forward(x, params):
    """x: (B, 5) float32.  params: w1(32,5), b1(32,1), w2(64,32), b2(64,1),
    w3(2,64), b3(2,1) — PyTorch [out, in] weight layout.  Returns (B, 2)."""
    B = x.shape[0]

    # Adaptive tile: one minimal-pad tile for small batches, 512-wide for big.
    tile_b = min(MAX_TILE_B, _round_up(B, 128))
    B_pad = _round_up(B, tile_b)
    n_tiles = B_pad // tile_b

    # Transpose to [features, batch] and zero-pad batch to a tile multiple.
    xT = jnp.zeros((5, B_pad), jnp.float32).at[:, :B].set(x.T.astype(jnp.float32))

    w1, b1 = params["w1"], params["b1"]
    w2, b2 = params["w2"], params["b2"]
    w3, b3 = params["w3"], params["b3"]

    weight_bytes = 4 * (w1.size + b1.size + w2.size + b2.size + w3.size + b3.size)
    cost = pl.CostEstimate(
        flops=2 * B_pad * (5 * 32 + 32 * 64 + 64 * 2),
        transcendentals=0,
        bytes_accessed=B_pad * (5 + 2) * 4 + weight_bytes,
    )

    const = lambda i: (0, 0)  # weights/biases: VMEM-resident, never re-DMA'd
    outT = pl.pallas_call(
        _mlp_kernel,
        out_shape=jax.ShapeDtypeStruct((2, B_pad), jnp.float32),
        grid_spec=pltpu.PrefetchScalarGridSpec(
            num_scalar_prefetch=0,
            grid=(n_tiles,),
            in_specs=[
                pl.BlockSpec((5, tile_b), lambda i: (0, i)),   # xT tile
                pl.BlockSpec((32, 5), const),                  # w1
                pl.BlockSpec((32, 1), const),                  # b1
                pl.BlockSpec((64, 32), const),                 # w2
                pl.BlockSpec((64, 1), const),                  # b2
                pl.BlockSpec((2, 64), const),                  # w3
                pl.BlockSpec((2, 1), const),                   # b3
            ],
            out_specs=pl.BlockSpec((2, tile_b), lambda i: (0, i)),
        ),
        compiler_params=pltpu.CompilerParams(
            dimension_semantics=("parallel",),
        ),
        cost_estimate=cost,
    )(xT, w1, b1, w2, b2, w3, b3)

    return outT[:, :B].T  # back to (B, 2)


def init_params(key):
    """Deterministic init matching nn.Linear shapes (PyTorch [out, in] layout)."""
    ks = jax.random.split(key, 6)

    def linear(kw, kb, fan_in, fan_out):
        bound = 1.0 / jnp.sqrt(fan_in)
        w = jax.random.uniform(kw, (fan_out, fan_in), jnp.float32, -bound, bound)
        b = jax.random.uniform(kb, (fan_out, 1), jnp.float32, -bound, bound)
        return w, b

    w1, b1 = linear(ks[0], ks[1], 5, 32)
    w2, b2 = linear(ks[2], ks[3], 32, 64)
    w3, b3 = linear(ks[4], ks[5], 64, 2)
    return {"w1": w1, "b1": b1, "w2": w2, "b2": b2, "w3": w3, "b3": b3}


def reference_forward(x, p):
    h1 = jnp.maximum(x @ p["w1"].T + p["b1"].T, 0.0)
    h2 = jnp.maximum(h1 @ p["w2"].T + p["b2"].T, 0.0)
    return h2 @ p["w3"].T + p["b3"].T


if __name__ == "__main__":
    key = jax.random.PRNGKey(0)
    k_x, k_p = jax.random.split(key)

    params = init_params(k_p)

    # Small batch (padded internally to a single 128-wide lane tile).
    B = 8
    x = jax.random.normal(k_x, (B, 5), jnp.float32)

    out = generator_ring_forward(x, params)
    out = jax.block_until_ready(out)

    ref = reference_forward(x, params)
    assert out.shape == (B, 2)
    assert jnp.allclose(out, ref, atol=1e-5, rtol=1e-5), "mismatch vs reference"

    # Larger, non-multiple-of-128 batch to exercise multi-tile grid + padding path.
    B2 = 1000
    x2 = jax.random.normal(jax.random.PRNGKey(1), (B2, 5), jnp.float32)
    out2 = jax.block_until_ready(generator_ring_forward(x2, params))
    ref2 = reference_forward(x2, params)
    assert out2.shape == (B2, 2)
    assert jnp.allclose(out2, ref2, atol=1e-5, rtol=1e-5), "mismatch vs reference (B2)"

    print("KERNEL_OK")
</pallas_src>

<mosaic_0001>
module attributes {stable_mosaic.version = 11 : i64} {
  func.func @_mlp_kernel(%arg0: i32, %arg1: memref<5x128xf32, #tpu.memory_space<vmem>>, %arg2: memref<32x5xf32, #tpu.memory_space<vmem>>, %arg3: memref<32x1xf32, #tpu.memory_space<vmem>>, %arg4: memref<64x32xf32, #tpu.memory_space<vmem>>, %arg5: memref<64x1xf32, #tpu.memory_space<vmem>>, %arg6: memref<2x64xf32, #tpu.memory_space<vmem>>, %arg7: memref<2x1xf32, #tpu.memory_space<vmem>>, %arg8: memref<2x128xf32, #tpu.memory_space<vmem>>) attributes {dimension_semantics = [#tpu.dimension_semantics<parallel>], iteration_bounds = array<i64: 1>, scalar_prefetch = 0 : i64, scratch_operands = 0 : i64, tpu.core_type = #tpu.core_type<tc>, window_params = [{transform_indices = @transform_0, window_bounds = array<i64: 5, 128>}, {pipeline_mode = #tpu.pipeline_mode<synchronous>, transform_indices = @transform_1, window_bounds = array<i64: 32, 5>}, {pipeline_mode = #tpu.pipeline_mode<synchronous>, transform_indices = @transform_2, window_bounds = array<i64: 32, 1>}, {pipeline_mode = #tpu.pipeline_mode<synchronous>, transform_indices = @transform_3, window_bounds = array<i64: 64, 32>}, {pipeline_mode = #tpu.pipeline_mode<synchronous>, transform_indices = @transform_4, window_bounds = array<i64: 64, 1>}, {pipeline_mode = #tpu.pipeline_mode<synchronous>, transform_indices = @transform_5, window_bounds = array<i64: 2, 64>}, {pipeline_mode = #tpu.pipeline_mode<synchronous>, transform_indices = @transform_6, window_bounds = array<i64: 2, 1>}, {transform_indices = @transform_7, window_bounds = array<i64: 2, 128>}]} {
    %c0 = arith.constant 0 : index
    %c0_0 = arith.constant 0 : index
    %0 = vector.load %arg1[%c0, %c0_0] : memref<5x128xf32, #tpu.memory_space<vmem>>, vector<5x128xf32>
    %c0_1 = arith.constant 0 : index
    %c0_2 = arith.constant 0 : index
    %1 = vector.load %arg2[%c0_1, %c0_2] : memref<32x5xf32, #tpu.memory_space<vmem>>, vector<32x5xf32>
    %c0_3 = arith.constant 0 : index
    %c0_4 = arith.constant 0 : index
    %2 = vector.load %arg3[%c0_3, %c0_4] : memref<32x1xf32, #tpu.memory_space<vmem>>, vector<32x1xf32>
    %3 = vector.extract_strided_slice %1 {offsets = [0, 0], sizes = [32, 1], strides = [1, 1]} : vector<32x5xf32> to vector<32x1xf32>
    %4 = vector.extract_strided_slice %0 {offsets = [0, 0], sizes = [1, 128], strides = [1, 1]} : vector<5x128xf32> to vector<1x128xf32>
    %5 = vector.broadcast %3 : vector<32x1xf32> to vector<32x128xf32>
    %6 = vector.broadcast %4 : vector<1x128xf32> to vector<32x128xf32>
    %7 = arith.mulf %5, %6 : vector<32x128xf32>
    %8 = vector.extract_strided_slice %1 {offsets = [0, 1], sizes = [32, 1], strides = [1, 1]} : vector<32x5xf32> to vector<32x1xf32>
    %9 = vector.extract_strided_slice %0 {offsets = [1, 0], sizes = [1, 128], strides = [1, 1]} : vector<5x128xf32> to vector<1x128xf32>
    %10 = vector.broadcast %8 : vector<32x1xf32> to vector<32x128xf32>
    %11 = vector.broadcast %9 : vector<1x128xf32> to vector<32x128xf32>
    %12 = arith.mulf %10, %11 : vector<32x128xf32>
    %13 = arith.addf %7, %12 : vector<32x128xf32>
    %14 = vector.extract_strided_slice %1 {offsets = [0, 2], sizes = [32, 1], strides = [1, 1]} : vector<32x5xf32> to vector<32x1xf32>
    %15 = vector.extract_strided_slice %0 {offsets = [2, 0], sizes = [1, 128], strides = [1, 1]} : vector<5x128xf32> to vector<1x128xf32>
    %16 = vector.broadcast %14 : vector<32x1xf32> to vector<32x128xf32>
    %17 = vector.broadcast %15 : vector<1x128xf32> to vector<32x128xf32>
    %18 = arith.mulf %16, %17 : vector<32x128xf32>
    %19 = arith.addf %13, %18 : vector<32x128xf32>
    %20 = vector.extract_strided_slice %1 {offsets = [0, 3], sizes = [32, 1], strides = [1, 1]} : vector<32x5xf32> to vector<32x1xf32>
    %21 = vector.extract_strided_slice %0 {offsets = [3, 0], sizes = [1, 128], strides = [1, 1]} : vector<5x128xf32> to vector<1x128xf32>
    %22 = vector.broadcast %20 : vector<32x1xf32> to vector<32x128xf32>
    %23 = vector.broadcast %21 : vector<1x128xf32> to vector<32x128xf32>
    %24 = arith.mulf %22, %23 : vector<32x128xf32>
    %25 = arith.addf %19, %24 : vector<32x128xf32>
    %26 = vector.extract_strided_slice %1 {offsets = [0, 4], sizes = [32, 1], strides = [1, 1]} : vector<32x5xf32> to vector<32x1xf32>
    %27 = vector.extract_strided_slice %0 {offsets = [4, 0], sizes = [1, 128], strides = [1, 1]} : vector<5x128xf32> to vector<1x128xf32>
    %28 = vector.broadcast %26 : vector<32x1xf32> to vector<32x128xf32>
    %29 = vector.broadcast %27 : vector<1x128xf32> to vector<32x128xf32>
    %30 = arith.mulf %28, %29 : vector<32x128xf32>
    %31 = arith.addf %25, %30 : vector<32x128xf32>
    %32 = vector.broadcast %2 : vector<32x1xf32> to vector<32x128xf32>
    %33 = arith.addf %31, %32 : vector<32x128xf32>
    %cst = arith.constant 0.000000e+00 : f32
    %34 = vector.broadcast %cst : f32 to vector<32x128xf32>
    %35 = arith.maximumf %33, %34 : vector<32x128xf32>
    %c0_5 = arith.constant 0 : index
    %c0_6 = arith.constant 0 : index
    %36 = vector.load %arg4[%c0_5, %c0_6] : memref<64x32xf32, #tpu.memory_space<vmem>>, vector<64x32xf32>
    %cst_7 = arith.constant dense<0.000000e+00> : vector<64x128xf32>
    %37 = tpu.matmul %36, %35, %cst_7 {dimension_numbers = #tpu.dot_dimension_numbers<[1], [0], [0], [1], [0, 0, 1, 1], [], []>} : vector<64x32xf32>, vector<32x128xf32>, vector<64x128xf32> -> vector<64x128xf32>
    %c0_8 = arith.constant 0 : index
    %c0_9 = arith.constant 0 : index
    %38 = vector.load %arg5[%c0_8, %c0_9] : memref<64x1xf32, #tpu.memory_space<vmem>>, vector<64x1xf32>
    %39 = vector.broadcast %38 : vector<64x1xf32> to vector<64x128xf32>
    %40 = arith.addf %37, %39 : vector<64x128xf32>
    %cst_10 = arith.constant 0.000000e+00 : f32
    %41 = vector.broadcast %cst_10 : f32 to vector<64x128xf32>
    %42 = arith.maximumf %40, %41 : vector<64x128xf32>
    %c0_11 = arith.constant 0 : index
    %c0_12 = arith.constant 0 : index
    %43 = vector.load %arg6[%c0_11, %c0_12] : memref<2x64xf32, #tpu.memory_space<vmem>>, vector<2x64xf32>
    %cst_13 = arith.constant dense<0.000000e+00> : vector<2x128xf32>
    %44 = tpu.matmul %43, %42, %cst_13 {dimension_numbers = #tpu.dot_dimension_numbers<[1], [0], [0], [1], [0, 0, 1, 1], [], []>} : vector<2x64xf32>, vector<64x128xf32>, vector<2x128xf32> -> vector<2x128xf32>
    %c0_14 = arith.constant 0 : index
    %c0_15 = arith.constant 0 : index
    %45 = vector.load %arg7[%c0_14, %c0_15] : memref<2x1xf32, #tpu.memory_space<vmem>>, vector<2x1xf32>
    %46 = vector.broadcast %45 : vector<2x1xf32> to vector<2x128xf32>
    %47 = arith.addf %44, %46 : vector<2x128xf32>
    %c0_16 = arith.constant 0 : index
    %c0_17 = arith.constant 0 : index
    %48 = vector.load %arg8[%c0_16, %c0_17] : memref<2x128xf32, #tpu.memory_space<vmem>>, vector<2x128xf32>
    tpu.vector_store %arg8[%c0_16, %c0_17], %47 {strides = array<i32>} : memref<2x128xf32, #tpu.memory_space<vmem>>, vector<2x128xf32>,
    return
  }
  func.func @transform_0(%arg0: i32) -> (i32, i32) {
    %c0_i32 = arith.constant 0 : i32
    %c0_i32_0 = arith.constant 0 : i32
    return %c0_i32, %arg0 : i32, i32
  }
  func.func @transform_1(%arg0: i32) -> (i32, i32) {
    %c0_i32 = arith.constant 0 : i32
    %c0_i32_0 = arith.constant 0 : i32
    %c0_i32_1 = arith.constant 0 : i32
    return %c0_i32, %c0_i32_0 : i32, i32
  }
  func.func @transform_2(%arg0: i32) -> (i32, i32) {
    %c0_i32 = arith.constant 0 : i32
    %c0_i32_0 = arith.constant 0 : i32
    %c0_i32_1 = arith.constant 0 : i32
    return %c0_i32, %c0_i32_0 : i32, i32
  }
  func.func @transform_3(%arg0: i32) -> (i32, i32) {
    %c0_i32 = arith.constant 0 : i32
    %c0_i32_0 = arith.constant 0 : i32
    %c0_i32_1 = arith.constant 0 : i32
    return %c0_i32, %c0_i32_0 : i32, i32
  }
  func.func @transform_4(%arg0: i32) -> (i32, i32) {
    %c0_i32 = arith.constant 0 : i32
    %c0_i32_0 = arith.constant 0 : i32
    %c0_i32_1 = arith.constant 0 : i32
    return %c0_i32, %c0_i32_0 : i32, i32
  }
  func.func @transform_5(%arg0: i32) -> (i32, i32) {
    %c0_i32 = arith.constant 0 : i32
    %c0_i32_0 = arith.constant 0 : i32
    %c0_i32_1 = arith.constant 0 : i32
    return %c0_i32, %c0_i32_0 : i32, i32
  }
  func.func @transform_6(%arg0: i32) -> (i32, i32) {
    %c0_i32 = arith.constant 0 : i32
    %c0_i32_0 = arith.constant 0 : i32
    %c0_i32_1 = arith.constant 0 : i32
    return %c0_i32, %c0_i32_0 : i32, i32
  }
  func.func @transform_7(%arg0: i32) -> (i32, i32) {
    %c0_i32 = arith.constant 0 : i32
    %c0_i32_0 = arith.constant 0 : i32
    return %c0_i32, %arg0 : i32, i32
  }
}

</mosaic_0001>

<llo_original>
// kernel: tpu_custom_call.1
$region0: #{tpu_custom_call.1}
  #allocation0 [shape = 'u32[]', space=smem, size = 0x4, offset = 0x4, fixed_abs, tag = 'smem constant byte address 0x4 - core index']
  #allocation1 [shape = 'u32[144,128]{1,0:T(1,128)}', space=vmem, size = 0x12000, scoped, tag = 'internal scratch']
  %s0 = inlined_call_operand.vmem [shape: f32[5,128], index: 0, kind: input, shape index: {}]
  %s1 = inlined_call_operand.vmem [shape: f32[32,5], index: 1, kind: input, shape index: {}]
  %s2 = inlined_call_operand.vmem [shape: f32[32,1], index: 2, kind: input, shape index: {}]
  %s3 = inlined_call_operand.vmem [shape: f32[64,32], index: 3, kind: input, shape index: {}]
  %s4 = inlined_call_operand.vmem [shape: f32[64,1], index: 4, kind: input, shape index: {}]
  %s5 = inlined_call_operand.vmem [shape: f32[2,64], index: 5, kind: input, shape index: {}]
  %s6 = inlined_call_operand.vmem [shape: f32[2,1], index: 6, kind: input, shape index: {}]
  %s7 = inlined_call_operand.hbm [shape: f32[2,128], index: 7, kind: output, shape index: {}]
  %s8 = sld [smem:[#allocation0]]
  $region38: #{tpu_custom_call.1} parent=0
    _
  %s10 = ssub.s32 1, %s8
  %s11 = scalar_select 0, %s10, %s8
  $region1: #{tpu_custom_call.1} parent=0
    #allocation2 [shape = 'u8[1024]{0}', space=vmem, size = 0x400, scoped, tag = 'output window, operand 0, single buffered']
    #allocation3 [shape = 's32[1]{0}', space=sflag, size = 0x4, scoped, tag = 'scoped memory for tpu_custom_call.1']
    %12 = vsyncpa [#allocation3], 0
    // Predicated region
    $region2: #{tpu_custom_call.1} parent=1 // pred_check
      _
    $region3: #{tpu_custom_call.1} parent=1 // pred_check_branch
      %14 = sbr.rel (0) target = $region5
    $region4: #{tpu_custom_call.1} parent=1 // pred_region
      _
    $region5: #{tpu_custom_call.1} parent=1 // pred_fallthru
      _
    // Predicated region
    $region6: #{tpu_custom_call.1} parent=1 // pred_check
      _
    $region7: #{tpu_custom_call.1} parent=1 // pred_check_branch
      %16 = sbr.rel (0) target = $region9
    $region8: #{tpu_custom_call.1} parent=1 // pred_region
      _
    $region9: #{tpu_custom_call.1} parent=1 // pred_fallthru
      _
    // Predicated region
    $region10: #{tpu_custom_call.1} parent=1 // pred_check
      _
    $region11: #{tpu_custom_call.1} parent=1 // pred_check_branch
      %18 = sbr.rel (0) target = $region13
    $region12: #{tpu_custom_call.1} parent=1 // pred_region
      _
    $region13: #{tpu_custom_call.1} parent=1 // pred_fallthru
      _
    // Predicated region
    $region14: #{tpu_custom_call.1} parent=1 // pred_check
      _
    $region15: #{tpu_custom_call.1} parent=1 // pred_check_branch
      %20 = sbr.rel (0) target = $region17
    $region16: #{tpu_custom_call.1} parent=1 // pred_region
      _
    $region17: #{tpu_custom_call.1} parent=1 // pred_fallthru
      _
    // Predicated region
    $region18: #{tpu_custom_call.1} parent=1 // pred_check
      _
    $region19: #{tpu_custom_call.1} parent=1 // pred_check_branch
      %22 = sbr.rel (0) target = $region21
    $region20: #{tpu_custom_call.1} parent=1 // pred_region
      _
    $region21: #{tpu_custom_call.1} parent=1 // pred_fallthru
      _
    // Predicated region
    $region22: #{tpu_custom_call.1} parent=1 // pred_check
      _
    $region23: #{tpu_custom_call.1} parent=1 // pred_check_branch
      %24 = sbr.rel (0) target = $region25
    $region24: #{tpu_custom_call.1} parent=1 // pred_region
      _
    $region25: #{tpu_custom_call.1} parent=1 // pred_fallthru
      _
    // Predicated region
    $region26: #{tpu_custom_call.1} parent=1 // pred_check
      _
    $region27: #{tpu_custom_call.1} parent=1 // pred_check_branch
      %26 = sbr.rel (0) target = $region29
    $region28: #{tpu_custom_call.1} parent=1 // pred_region
      _
    $region29: #{tpu_custom_call.1} parent=1 // pred_fallthru
      _
    %v27 = vld [vmem:[%s0] sm:$0x1f]
    %v28 = vld [vmem:[%s1] sm:$0xff]
    %v29 = vld [vmem:[%s1 + $0x8] sm:$0xff]
    %v30 = vld [vmem:[%s1 + $0x10] sm:$0xff]
    %v31 = vld [vmem:[%s1 + $0x18] sm:$0xff]
    %v32 = vld [vmem:[%s2] sm:$0xff]
    %v33 = vld [vmem:[%s2 + $0x8] sm:$0xff]
    %v34 = vld [vmem:[%s2 + $0x10] sm:$0xff]
    %v35 = vld [vmem:[%s2 + $0x18] sm:$0xff]
    %37 = vset.pattern.permute.xlu0 0
    %38 = vperm.xlu0 %37, %v28
    %v39 = vpop.permute.xlu0 %38
    %42 = vset.pattern.permute.xlu0 0
    %43 = vperm.xlu0 %42, %v29
    %v44 = vpop.permute.xlu0 %43
    %47 = vset.pattern.permute.xlu0 0
    %48 = vperm.xlu0 %47, %v30
    %v49 = vpop.permute.xlu0 %48
    %52 = vset.pattern.permute.xlu0 0
    %53 = vperm.xlu0 %52, %v31
    %v54 = vpop.permute.xlu0 %53
    %v56 = vlaneseq
    %v57 = vshrl.u32 %v56, 7
    %v58 = vsub.s32 0, %v57
    %v59 = vrot.slane %v27, %v58
    %v60 = vmul.f32 %v39, %v59
    %v61 = vmul.f32 %v44, %v59
    %v62 = vmul.f32 %v49, %v59
    %v63 = vmul.f32 %v54, %v59
    %64 = vset.pattern.permute.xlu0 1
    %65 = vperm.xlu0 %64, %v28
    %v66 = vpop.permute.xlu0 %65
    %68 = vset.pattern.permute.xlu0 1
    %69 = vperm.xlu0 %68, %v29
    %v70 = vpop.permute.xlu0 %69
    %72 = vset.pattern.permute.xlu0 1
    %73 = vperm.xlu0 %72, %v30
    %v74 = vpop.permute.xlu0 %73
    %76 = vset.pattern.permute.xlu0 1
    %77 = vperm.xlu0 %76, %v31
    %v78 = vpop.permute.xlu0 %77
    %v80 = vlaneseq
    %v81 = vshrl.u32 %v80, 7
    %v82 = vsub.s32 1, %v81
    %v83 = vrot.slane %v27, %v82
    %v84 = vmul.f32 %v66, %v83
    %v85 = vmul.f32 %v70, %v83
    %v86 = vmul.f32 %v74, %v83
    %v87 = vmul.f32 %v78, %v83
    %v88 = vadd.f32 %v60, %v84
    %v89 = vadd.f32 %v61, %v85
    %v90 = vadd.f32 %v62, %v86
    %v91 = vadd.f32 %v63, %v87
    %92 = vset.pattern.permute.xlu0 2
    %93 = vperm.xlu0 %92, %v28
    %v94 = vpop.permute.xlu0 %93
    %96 = vset.pattern.permute.xlu0 2
    %97 = vperm.xlu0 %96, %v29
    %v98 = vpop.permute.xlu0 %97
    %100 = vset.pattern.permute.xlu0 2
    %101 = vperm.xlu0 %100, %v30
    %v102 = vpop.permute.xlu0 %101
    %104 = vset.pattern.permute.xlu0 2
    %105 = vperm.xlu0 %104, %v31
    %v106 = vpop.permute.xlu0 %105
    %v108 = vlaneseq
    %v109 = vshrl.u32 %v108, 7
    %v110 = vsub.s32 2, %v109
    %v111 = vrot.slane %v27, %v110
    %v112 = vmul.f32 %v94, %v111
    %v113 = vmul.f32 %v98, %v111
    %v114 = vmul.f32 %v102, %v111
    %v115 = vmul.f32 %v106, %v111
    %v116 = vadd.f32 %v88, %v112
    %v117 = vadd.f32 %v89, %v113
    %v118 = vadd.f32 %v90, %v114
    %v119 = vadd.f32 %v91, %v115
    %120 = vset.pattern.permute.xlu0 3
    %121 = vperm.xlu0 %120, %v28
    %v122 = vpop.permute.xlu0 %121
    %124 = vset.pattern.permute.xlu0 3
    %125 = vperm.xlu0 %124, %v29
    %v126 = vpop.permute.xlu0 %125
    %128 = vset.pattern.permute.xlu0 3
    %129 = vperm.xlu0 %128, %v30
    %v130 = vpop.permute.xlu0 %129
    %132 = vset.pattern.permute.xlu0 3
    %133 = vperm.xlu0 %132, %v31
    %v134 = vpop.permute.xlu0 %133
    %v136 = vlaneseq
    %v137 = vshrl.u32 %v136, 7
    %v138 = vsub.s32 3, %v137
    %v139 = vrot.slane %v27, %v138
    %v140 = vmul.f32 %v122, %v139
    %v141 = vmul.f32 %v126, %v139
    %v142 = vmul.f32 %v130, %v139
    %v143 = vmul.f32 %v134, %v139
    %v144 = vadd.f32 %v116, %v140
    %v145 = vadd.f32 %v117, %v141
    %v146 = vadd.f32 %v118, %v142
    %v147 = vadd.f32 %v119, %v143
    %148 = vset.pattern.permute.xlu0 4
    %149 = vperm.xlu0 %148, %v28
    %v150 = vpop.permute.xlu0 %149
    %152 = vset.pattern.permute.xlu0 4
    %153 = vperm.xlu0 %152, %v29
    %v154 = vpop.permute.xlu0 %153
    %156 = vset.pattern.permute.xlu0 4
    %157 = vperm.xlu0 %156, %v30
    %v158 = vpop.permute.xlu0 %157
    %160 = vset.pattern.permute.xlu0 4
    %161 = vperm.xlu0 %160, %v31
    %v162 = vpop.permute.xlu0 %161
    %v164 = vlaneseq
    %v165 = vshrl.u32 %v164, 7
    %v166 = vsub.s32 4, %v165
    %v167 = vrot.slane %v27, %v166
    %v168 = vmul.f32 %v150, %v167
    %v169 = vmul.f32 %v154, %v167
    %v170 = vmul.f32 %v158, %v167
    %v171 = vmul.f32 %v162, %v167
    %v172 = vadd.f32 %v144, %v168
    %v173 = vadd.f32 %v145, %v169
    %v174 = vadd.f32 %v146, %v170
    %v175 = vadd.f32 %v147, %v171
    %177 = vset.pattern.permute.xlu0 0
    %178 = vperm.xlu0 %177, %v32
    %v179 = vpop.permute.xlu0 %178
    %182 = vset.pattern.permute.xlu0 0
    %183 = vperm.xlu0 %182, %v33
    %v184 = vpop.permute.xlu0 %183
    %187 = vset.pattern.permute.xlu0 0
    %188 = vperm.xlu0 %187, %v34
    %v189 = vpop.permute.xlu0 %188
    %192 = vset.pattern.permute.xlu0 0
    %193 = vperm.xlu0 %192, %v35
    %v194 = vpop.permute.xlu0 %193
    %v196 = vadd.f32 %v172, %v179
    %v197 = vadd.f32 %v173, %v184
    %v198 = vadd.f32 %v174, %v189
    %v199 = vadd.f32 %v175, %v194
    %v200 = vmax.f32 %v196, 0.0
    %v201 = vmax.f32 %v197, 0.0
    %v202 = vmax.f32 %v198, 0.0
    %v203 = vmax.f32 %v199, 0.0
    %v204 = vld [vmem:[%s3] sm:$0xff]
    %v205 = vld [vmem:[%s3 + $0x8] sm:$0xff]
    %v206 = vld [vmem:[%s3 + $0x10] sm:$0xff]
    %v207 = vld [vmem:[%s3 + $0x18] sm:$0xff]
    %v208 = vld [vmem:[%s3 + $0x20] sm:$0xff]
    %v209 = vld [vmem:[%s3 + $0x28] sm:$0xff]
    %v210 = vld [vmem:[%s3 + $0x30] sm:$0xff]
    %v211 = vld [vmem:[%s3 + $0x38] sm:$0xff]
    %v212 = vld [vmem:[%s4] sm:$0xff]
    %v213 = vld [vmem:[%s4 + $0x8] sm:$0xff]
    %v214 = vld [vmem:[%s4 + $0x10] sm:$0xff]
    %v215 = vld [vmem:[%s4 + $0x18] sm:$0xff]
    %v216 = vld [vmem:[%s4 + $0x20] sm:$0xff]
    %v217 = vld [vmem:[%s4 + $0x28] sm:$0xff]
    %v218 = vld [vmem:[%s4 + $0x30] sm:$0xff]
    %v219 = vld [vmem:[%s4 + $0x38] sm:$0xff]
    %221 = vset.pattern.permute.xlu0 0
    %222 = vperm.xlu0 %221, %v212
    %v223 = vpop.permute.xlu0 %222
    %226 = vset.pattern.permute.xlu0 0
    %227 = vperm.xlu0 %226, %v213
    %v228 = vpop.permute.xlu0 %227
    %231 = vset.pattern.permute.xlu0 0
    %232 = vperm.xlu0 %231, %v214
    %v233 = vpop.permute.xlu0 %232
    %236 = vset.pattern.permute.xlu0 0
    %237 = vperm.xlu0 %236, %v215
    %v238 = vpop.permute.xlu0 %237
    %241 = vset.pattern.permute.xlu0 0
    %242 = vperm.xlu0 %241, %v216
    %v243 = vpop.permute.xlu0 %242
    %246 = vset.pattern.permute.xlu0 0
    %247 = vperm.xlu0 %246, %v217
    %v248 = vpop.permute.xlu0 %247
    %251 = vset.pattern.permute.xlu0 0
    %252 = vperm.xlu0 %251, %v218
    %v253 = vpop.permute.xlu0 %252
    %256 = vset.pattern.permute.xlu0 0
    %257 = vperm.xlu0 %256, %v219
    %v258 = vpop.permute.xlu0 %257
    %vm260 = vcmask 261120
    %v262 = vsel %vm260, %v204, 0
    %v265 = vsel %vm260, %v205, 0
    %v268 = vsel %vm260, %v206, 0
    %v271 = vsel %vm260, %v207, 0
    %v274 = vsel %vm260, %v208, 0
    %v277 = vsel %vm260, %v209, 0
    %v280 = vsel %vm260, %v210, 0
    %v283 = vsel %vm260, %v211, 0
    %285 = vmatprep.subr.mxu0 0.0
    %286 = vmatpush1.msra.mxu0 0.0
    %287 = vmatprep.subr.mxu0 0.0
    %288 = vmatpush1.msra.mxu0 0.0
    %289 = vmatprep.subr.mxu0 0.0
    %290 = vmatpush1.msra.mxu0 0.0
    %291 = vmatprep.subr.mxu0 0.0
    %292 = vmatpush1.msra.mxu0 0.0
    %293 = vmatprep.subr.mxu0 0.0
    %294 = vmatpush1.msra.mxu0 0.0
    %295 = vmatprep.subr.mxu0 0.0
    %296 = vmatpush1.msra.mxu0 0.0
    %297 = vmatprep.subr.mxu0 0.0
    %298 = vmatpush1.msra.mxu0 0.0
    %299 = vmatprep.subr.mxu0 0.0
    %300 = vmatpush1.msra.mxu0 0.0
    %301 = vmatprep.subr.mxu0 0.0
    %302 = vmatpush1.msra.mxu0 0.0
    %303 = vmatprep.subr.mxu0 0.0
    %304 = vmatpush1.msra.mxu0 0.0
    %305 = vmatprep.subr.mxu0 0.0
    %306 = vmatpush1.msra.mxu0 0.0
    %307 = vmatprep.subr.mxu0 0.0
    %308 = vmatpush1.msra.mxu0 0.0
    %309 = vmatprep.subr.mxu0 0.0
    %310 = vmatpush1.msra.mxu0 %v203
    %311 = vmatprep.subr.mxu0 0.0
    %312 = vmatpush1.msra.mxu0 %v202
    %313 = vmatprep.subr.mxu0 0.0
    %314 = vmatpush1.msra.mxu0 %v201
    %315 = vmatprep.subr.mxu0 0.0
    %316 = vmatpush1.msra.mxu0 %v200
    %317 = vmatprep.subr.mxu0 0.0
    %318 = vmatpush2.msra.mxu0 0.0
    %319 = vmatprep.subr.mxu0 0.0
    %320 = vmatpush2.msra.mxu0 0.0
    %321 = vmatprep.subr.mxu0 0.0
    %322 = vmatpush2.msra.mxu0 0.0
    %323 = vmatprep.subr.mxu0 0.0
    %324 = vmatpush2.msra.mxu0 0.0
    %325 = vmatprep.subr.mxu0 0.0
    %326 = vmatpush2.msra.mxu0 0.0
    %327 = vmatprep.subr.mxu0 0.0
    %328 = vmatpush2.msra.mxu0 0.0
    %329 = vmatprep.subr.mxu0 0.0
    %330 = vmatpush2.msra.mxu0 0.0
    %331 = vmatprep.subr.mxu0 0.0
    %332 = vmatpush2.msra.mxu0 0.0
    %333 = vmatprep.subr.mxu0 0.0
    %334 = vmatpush2.msra.mxu0 0.0
    %335 = vmatprep.subr.mxu0 0.0
    %336 = vmatpush2.msra.mxu0 0.0
    %337 = vmatprep.subr.mxu0 0.0
    %338 = vmatpush2.msra.mxu0 0.0
    %339 = vmatprep.subr.mxu0 0.0
    %340 = vmatpush2.msra.mxu0 0.0
    %341 = vmatprep.subr.mxu0 0.0
    %342 = vmatpush2.msra.mxu0 0.0
    %343 = vmatprep.subr.mxu0 0.0
    %344 = vmatpush2.msra.mxu0 0.0
    %345 = vmatprep.subr.mxu0 0.0
    %346 = vmatpush2.msra.mxu0 0.0
    %347 = vmatprep.subr.mxu0 0.0
    %348 = vmatpush2.msra.mxu0 0.0
    %349 = vmatprep.mubr.f32.mxu0 0.0
    %350 = vmatmul.mubr.f32.gmra.mxu0 %v262
    %v351 = vpop.f32.mrf.mxu0
    %v352 = vadd.f32 %v223, %v351
    %v353 = vpop.f32.mrf.mxu0
    %354 = vmatprep.mubr.f32.mxu0 0.0
    %355 = vmatmul.mubr.f32.gmra.mxu0 %v265
    %v356 = vpop.f32.mrf.mxu0
    %v357 = vadd.f32 %v228, %v356
    %v358 = vpop.f32.mrf.mxu0
    %359 = vmatprep.mubr.f32.mxu0 0.0
    %360 = vmatmul.mubr.f32.gmra.mxu0 %v268
    %v361 = vpop.f32.mrf.mxu0
    %v362 = vadd.f32 %v233, %v361
    %v363 = vpop.f32.mrf.mxu0
    %364 = vmatprep.mubr.f32.mxu0 0.0
    %365 = vmatmul.mubr.f32.gmra.mxu0 %v271
    %v366 = vpop.f32.mrf.mxu0
    %v367 = vadd.f32 %v238, %v366
    %v368 = vpop.f32.mrf.mxu0
    %369 = vmatprep.mubr.f32.mxu0 0.0
    %370 = vmatmul.mubr.f32.gmra.mxu0 %v274
    %v371 = vpop.f32.mrf.mxu0
    %v372 = vadd.f32 %v243, %v371
    %v373 = vpop.f32.mrf.mxu0
    %374 = vmatprep.mubr.f32.mxu0 0.0
    %375 = vmatmul.mubr.f32.gmra.mxu0 %v277
    %v376 = vpop.f32.mrf.mxu0
    %v377 = vadd.f32 %v248, %v376
    %v378 = vpop.f32.mrf.mxu0
    %379 = vmatprep.mubr.f32.mxu0 0.0
    %380 = vmatmul.mubr.f32.gmra.mxu0 %v280
    %v381 = vpop.f32.mrf.mxu0
    %v382 = vadd.f32 %v253, %v381
    %v383 = vpop.f32.mrf.mxu0
    %384 = vmatprep.mubr.f32.mxu0 0.0
    %385 = vmatmul.mubr.f32.gmra.mxu0 %v283
    %v386 = vpop.f32.mrf.mxu0
    %v387 = vadd.f32 %v258, %v386
    %v388 = vpop.f32.mrf.mxu0
    %389 = vdwg.mxu0
    %v390 = vmax.f32 %v352, 0.0
    %v391 = vmax.f32 %v357, 0.0
    %v392 = vmax.f32 %v362, 0.0
    %v393 = vmax.f32 %v367, 0.0
    %v394 = vmax.f32 %v372, 0.0
    %v395 = vmax.f32 %v377, 0.0
    %v396 = vmax.f32 %v382, 0.0
    %v397 = vmax.f32 %v387, 0.0
    %v398 = vld [vmem:[%s5] sm:$0x3]
    %v399 = vld [vmem:[%s6] sm:$0x3]
    %401 = vset.pattern.permute.xlu0 0
    %402 = vperm.xlu0 %401, %v399
    %v403 = vpop.permute.xlu0 %402
    %vm405 = vcmask 523264
    %v407 = vsel %vm405, %v398, 0
    %409 = vmatprep.subr.mxu0 0.0
    %410 = vmatpush1.msra.mxu0 0.0
    %411 = vmatprep.subr.mxu0 0.0
    %412 = vmatpush1.msra.mxu0 0.0
    %413 = vmatprep.subr.mxu0 0.0
    %414 = vmatpush1.msra.mxu0 0.0
    %415 = vmatprep.subr.mxu0 0.0
    %416 = vmatpush1.msra.mxu0 0.0
    %417 = vmatprep.subr.mxu0 0.0
    %418 = vmatpush1.msra.mxu0 0.0
    %419 = vmatprep.subr.mxu0 0.0
    %420 = vmatpush1.msra.mxu0 0.0
    %421 = vmatprep.subr.mxu0 0.0
    %422 = vmatpush1.msra.mxu0 0.0
    %423 = vmatprep.subr.mxu0 0.0
    %424 = vmatpush1.msra.mxu0 0.0
    %425 = vmatprep.subr.mxu0 0.0
    %426 = vmatpush1.msra.mxu0 %v397
    %427 = vmatprep.subr.mxu0 0.0
    %428 = vmatpush1.msra.mxu0 %v396
    %429 = vmatprep.subr.mxu0 0.0
    %430 = vmatpush1.msra.mxu0 %v395
    %431 = vmatprep.subr.mxu0 0.0
    %432 = vmatpush1.msra.mxu0 %v394
    %433 = vmatprep.subr.mxu0 0.0
    %434 = vmatpush1.msra.mxu0 %v393
    %435 = vmatprep.subr.mxu0 0.0
    %436 = vmatpush1.msra.mxu0 %v392
    %437 = vmatprep.subr.mxu0 0.0
    %438 = vmatpush1.msra.mxu0 %v391
    %439 = vmatprep.subr.mxu0 0.0
    %440 = vmatpush1.msra.mxu0 %v390
    %441 = vmatprep.subr.mxu0 0.0
    %442 = vmatpush2.msra.mxu0 0.0
    %443 = vmatprep.subr.mxu0 0.0
    %444 = vmatpush2.msra.mxu0 0.0
    %445 = vmatprep.subr.mxu0 0.0
    %446 = vmatpush2.msra.mxu0 0.0
    %447 = vmatprep.subr.mxu0 0.0
    %448 = vmatpush2.msra.mxu0 0.0
    %449 = vmatprep.subr.mxu0 0.0
    %450 = vmatpush2.msra.mxu0 0.0
    %451 = vmatprep.subr.mxu0 0.0
    %452 = vmatpush2.msra.mxu0 0.0
    %453 = vmatprep.subr.mxu0 0.0
    %454 = vmatpush2.msra.mxu0 0.0
    %455 = vmatprep.subr.mxu0 0.0
    %456 = vmatpush2.msra.mxu0 0.0
    %457 = vmatprep.subr.mxu0 0.0
    %458 = vmatpush2.msra.mxu0 0.0
    %459 = vmatprep.subr.mxu0 0.0
    %460 = vmatpush2.msra.mxu0 0.0
    %461 = vmatprep.subr.mxu0 0.0
    %462 = vmatpush2.msra.mxu0 0.0
    %463 = vmatprep.subr.mxu0 0.0
    %464 = vmatpush2.msra.mxu0 0.0
    %465 = vmatprep.subr.mxu0 0.0
    %466 = vmatpush2.msra.mxu0 0.0
    %467 = vmatprep.subr.mxu0 0.0
    %468 = vmatpush2.msra.mxu0 0.0
    %469 = vmatprep.subr.mxu0 0.0
    %470 = vmatpush2.msra.mxu0 0.0
    %471 = vmatprep.subr.mxu0 0.0
    %472 = vmatpush2.msra.mxu0 0.0
    %473 = vmatprep.mubr.f32.mxu0 0.0
    %474 = vmatmul.mubr.f32.gmra.mxu0 %v407
    %v475 = vpop.f32.mrf.mxu0
    %v476 = vadd.f32 %v403, %v475
    %v477 = vpop.f32.mrf.mxu0
    %478 = vdwg.mxu0
    %479 = vst [vmem:[#allocation2] sm:$0x3] %v476
    // Predicated region
    $region30: #{tpu_custom_call.1} parent=1 // pred_check
      _
    $region31: #{tpu_custom_call.1} parent=1 // pred_check_branch
      %481 = sbr.rel (0) target = $region33
    $region32: #{tpu_custom_call.1} parent=1 // pred_region
      %s483 = ssub.s32 32, 32
      %484 = vsyncadd [#allocation3], %s483
      %s486 = sshll.u32 [#allocation2], 4
      %s487 = int_to_ptr.vmem [resolvable:$true] %s486
      %489 = dma.vmem_to_hbm [thread:$0]  %s487, 32, %s7, [#allocation3]
    $region33: #{tpu_custom_call.1} parent=1 // pred_fallthru
      _
    // Predicated region
    $region34: #{tpu_custom_call.1} parent=1 // pred_check
      _
    $region35: #{tpu_custom_call.1} parent=1 // pred_check_branch
      %491 = sbr.rel (0) target = $region37
    $region36: #{tpu_custom_call.1} parent=1 // pred_region
      %492 = dma.done [#allocation3], 32
    $region37: #{tpu_custom_call.1} parent=1 // pred_fallthru
      _
    %493 = vsyncpa [#allocation3], 1

</llo_original>
